<compile_context>
chip_gen: v7x
topology: tpu7x:2x2x1
jax: 0.10.0
libtpu: 0.0.40
codegen_flags: <defaults>
</compile_context>

<pallas_src>
import functools
import numpy as np
import jax
import jax.numpy as jnp
from jax.experimental import pallas as pl
from jax.experimental.pallas import tpu as pltpu


def _round_up(x, m):
    return ((x + m - 1) // m) * m


def _sine_layer_kernel(x_ref, w_ref, b_ref, o_ref, *, omega_0):
    # One batch tile per grid step: matmul (MXU, f32 accumulate) + bias + sin.
    z = jnp.dot(x_ref[...], w_ref[...], preferred_element_type=jnp.float32)
    z = z + b_ref[...]
    o_ref[...] = jnp.sin(omega_0 * z).astype(o_ref.dtype)


def sine_layer(x, w_t, b, omega_0=30.0, *, tile_b=512):
    """x: (B, Fin) f32; w_t: (Fin, Fout) f32; b: (1, Fout) f32 -> (B, Fout) f32."""
    B, Fin = x.shape
    Fin2, Fout = w_t.shape
    assert Fin == Fin2 and b.shape == (1, Fout)

    # --- choose batch tile & pad shapes ------------------------------------
    # Lane-dense output: pad Fout to a multiple of 128 (masked partial stores
    # are the dominant store-side cost for narrow outputs).
    Fout_p = _round_up(Fout, 128)
    # Batch tile: big enough to hide DMA / per-step overhead, but never larger
    # than the (sublane-rounded) batch itself.
    TB = min(tile_b, _round_up(B, 8))
    B_p = _round_up(B, TB)

    x_p = x if B_p == B else jnp.pad(x, ((0, B_p - B), (0, 0)))
    if Fout_p != Fout:
        w_p = jnp.pad(w_t, ((0, 0), (0, Fout_p - Fout)))
        b_p = jnp.pad(b, ((0, 0), (0, Fout_p - Fout)))
    else:
        w_p, b_p = w_t, b

    n_tiles = B_p // TB

    kernel = functools.partial(_sine_layer_kernel, omega_0=float(omega_0))

    cost = pl.CostEstimate(
        flops=2 * B_p * Fin * Fout_p,
        transcendentals=B_p * Fout_p,
        bytes_accessed=(x_p.size + w_p.size + b_p.size + B_p * Fout_p) * 4,
    )

    out_p = pl.pallas_call(
        kernel,
        out_shape=jax.ShapeDtypeStruct((B_p, Fout_p), x.dtype),
        grid_spec=pltpu.PrefetchScalarGridSpec(
            num_scalar_prefetch=0,
            grid=(n_tiles,),
            in_specs=[
                # x: one batch tile per grid step (double-buffered by Pallas)
                pl.BlockSpec((TB, Fin), lambda i: (i, 0)),
                # weight / bias: constant index map -> resident, DMA'd once
                pl.BlockSpec((Fin, Fout_p), lambda i: (0, 0)),
                pl.BlockSpec((1, Fout_p), lambda i: (0, 0)),
            ],
            out_specs=pl.BlockSpec((TB, Fout_p), lambda i: (i, 0)),
        ),
        compiler_params=pltpu.CompilerParams(
            # batch tiles are independent -> megacore sharding on v7x,
            # neutral on v5e/v6e.
            dimension_semantics=("parallel",),
            # headroom for v7x (64 MiB physical VMEM); well above the 16/32 MiB
            # default scoped limits on v5e/v6e so big tiles fit double-buffered.
            vmem_limit_bytes=48 * 1024 * 1024,
        ),
        cost_estimate=cost,
    )(x_p, w_p, b_p)

    # Strip padding outside the kernel.
    return out_p[:B, :Fout]


def init_sine_layer_params(key, in_features, out_features, is_first=False,
                           omega_0=30.0, bias=True):
    """Deterministic SIREN init (matches SineLayer.init_weights semantics)."""
    k_w, k_b = jax.random.split(key)
    if is_first:
        bound = 1.0 / in_features
    else:
        bound = np.sqrt(6.0 / in_features) / omega_0
    # PyTorch stores weight as (out, in); we keep the transposed (in, out) layout.
    w_t = jax.random.uniform(k_w, (in_features, out_features),
                             dtype=jnp.float32, minval=-bound, maxval=bound)
    if bias:
        # nn.Linear default bias init: U(-1/sqrt(in), 1/sqrt(in))
        b_bound = 1.0 / np.sqrt(in_features)
        b = jax.random.uniform(k_b, (1, out_features), dtype=jnp.float32,
                               minval=-b_bound, maxval=b_bound)
    else:
        b = jnp.zeros((1, out_features), dtype=jnp.float32)
    return w_t, b


if __name__ == "__main__":
    key = jax.random.PRNGKey(0)
    k_x, k_p = jax.random.split(key)

    batch = 8
    in_features = 32
    out_features = 64
    omega_0 = 30.0

    x = jax.random.normal(k_x, (batch, in_features), dtype=jnp.float32)
    w_t, b = init_sine_layer_params(k_p, in_features, out_features,
                                    is_first=True, omega_0=omega_0, bias=True)

    out = sine_layer(x, w_t, b, omega_0=omega_0)
    out = jax.block_until_ready(out)

    # pure-JAX reference check
    ref = jnp.sin(omega_0 * (x @ w_t + b))
    np.testing.assert_allclose(np.asarray(out), np.asarray(ref),
                               rtol=1e-5, atol=1e-5)

    print("KERNEL_OK")
</pallas_src>

<mosaic_0001>
module attributes {stable_mosaic.version = 11 : i64} {
  func.func @_sine_layer_kernel(%arg0: i32, %arg1: memref<8x32xf32, #tpu.memory_space<vmem>>, %arg2: memref<32x128xf32, #tpu.memory_space<vmem>>, %arg3: memref<1x128xf32, #tpu.memory_space<vmem>>, %arg4: memref<8x128xf32, #tpu.memory_space<vmem>>) attributes {dimension_semantics = [#tpu.dimension_semantics<parallel>], iteration_bounds = array<i64: 1>, scalar_prefetch = 0 : i64, scratch_operands = 0 : i64, tpu.core_type = #tpu.core_type<tc>, window_params = [{transform_indices = @transform_0, window_bounds = array<i64: 8, 32>}, {pipeline_mode = #tpu.pipeline_mode<synchronous>, transform_indices = @transform_1, window_bounds = array<i64: 32, 128>}, {pipeline_mode = #tpu.pipeline_mode<synchronous>, transform_indices = @transform_2, window_bounds = array<i64: 1, 128>}, {transform_indices = @transform_3, window_bounds = array<i64: 8, 128>}]} {
    %c0 = arith.constant 0 : index
    %c0_0 = arith.constant 0 : index
    %0 = vector.load %arg1[%c0, %c0_0] : memref<8x32xf32, #tpu.memory_space<vmem>>, vector<8x32xf32>
    %c0_1 = arith.constant 0 : index
    %c0_2 = arith.constant 0 : index
    %1 = vector.load %arg2[%c0_1, %c0_2] : memref<32x128xf32, #tpu.memory_space<vmem>>, vector<32x128xf32>
    %cst = arith.constant dense<0.000000e+00> : vector<8x128xf32>
    %2 = tpu.matmul %0, %1, %cst {dimension_numbers = #tpu.dot_dimension_numbers<[1], [0], [0], [1], [0, 0, 1, 1], [], []>} : vector<8x32xf32>, vector<32x128xf32>, vector<8x128xf32> -> vector<8x128xf32>
    %c0_3 = arith.constant 0 : index
    %c0_4 = arith.constant 0 : index
    %3 = vector.load %arg3[%c0_3, %c0_4] : memref<1x128xf32, #tpu.memory_space<vmem>>, vector<1x128xf32>
    %4 = vector.broadcast %3 : vector<1x128xf32> to vector<8x128xf32>
    %5 = arith.addf %2, %4 : vector<8x128xf32>
    %cst_5 = arith.constant 3.000000e+01 : f32
    %6 = vector.broadcast %cst_5 : f32 to vector<8x128xf32>
    %7 = arith.mulf %6, %5 : vector<8x128xf32>
    %8 = math.sin %7 : vector<8x128xf32>
    %c0_6 = arith.constant 0 : index
    %c0_7 = arith.constant 0 : index
    %9 = vector.load %arg4[%c0_6, %c0_7] : memref<8x128xf32, #tpu.memory_space<vmem>>, vector<8x128xf32>
    tpu.vector_store %arg4[%c0_6, %c0_7], %8 {strides = array<i32>} : memref<8x128xf32, #tpu.memory_space<vmem>>, vector<8x128xf32>,
    return
  }
  func.func @transform_0(%arg0: i32) -> (i32, i32) {
    %c0_i32 = arith.constant 0 : i32
    %c0_i32_0 = arith.constant 0 : i32
    return %arg0, %c0_i32 : i32, i32
  }
  func.func @transform_1(%arg0: i32) -> (i32, i32) {
    %c0_i32 = arith.constant 0 : i32
    %c0_i32_0 = arith.constant 0 : i32
    %c0_i32_1 = arith.constant 0 : i32
    return %c0_i32, %c0_i32_0 : i32, i32
  }
  func.func @transform_2(%arg0: i32) -> (i32, i32) {
    %c0_i32 = arith.constant 0 : i32
    %c0_i32_0 = arith.constant 0 : i32
    %c0_i32_1 = arith.constant 0 : i32
    return %c0_i32, %c0_i32_0 : i32, i32
  }
  func.func @transform_3(%arg0: i32) -> (i32, i32) {
    %c0_i32 = arith.constant 0 : i32
    %c0_i32_0 = arith.constant 0 : i32
    return %arg0, %c0_i32 : i32, i32
  }
}

</mosaic_0001>

<llo_original>
// kernel: tpu_custom_call.1
$region0: #{tpu_custom_call.1}
  #allocation0 [shape = 'u32[]', space=smem, size = 0x4, offset = 0x4, fixed_abs, tag = 'smem constant byte address 0x4 - core index']
  #allocation1 [shape = 'u32[144,128]{1,0:T(1,128)}', space=vmem, size = 0x12000, scoped, tag = 'internal scratch']
  %s0 = inlined_call_operand.hbm [shape: f32[8,32], index: 0, kind: input, shape index: {}]
  %s1 = inlined_call_operand.hbm [shape: f32[32,128], index: 1, kind: input, shape index: {}]
  %s2 = inlined_call_operand.vmem [shape: f32[1,128], index: 2, kind: input, shape index: {}]
  %s3 = inlined_call_operand.hbm [shape: f32[8,128], index: 3, kind: output, shape index: {}]
  %s4 = sld [smem:[#allocation0]]
  $region30: #{tpu_custom_call.1} parent=0
    _
  %s6 = ssub.s32 1, %s4
  %s7 = scalar_select 0, %s6, %s4
  $region1: #{tpu_custom_call.1} parent=0
    #allocation2 [shape = 'u8[4096]{0}', space=vmem, size = 0x1000, scoped, tag = 'input window, operand 0, single buffered']
    #allocation3 [shape = 's32[1]{0}', space=sflag, size = 0x4, scoped, tag = 'scoped memory for tpu_custom_call.1']
    #allocation4 [shape = 's32[1]{0}', space=sflag, size = 0x4, scoped, tag = 'scoped memory for tpu_custom_call.1']
    #allocation5 [shape = 'u8[16384]{0}', space=vmem, size = 0x4000, scoped, tag = 'input window, operand 1, single buffered']
    #allocation6 [shape = 's32[1]{0}', space=sflag, size = 0x4, scoped, tag = 'scoped memory for tpu_custom_call.1']
    #allocation7 [shape = 'u8[4096]{0}', space=vmem, size = 0x1000, scoped, tag = 'output window, operand 0, single buffered']
    %8 = vsyncpa [#allocation3], 0
    %9 = vsyncpa [#allocation6], 0
    %10 = vsyncpa [#allocation4], 0
    // Predicated region
    $region2: #{tpu_custom_call.1} parent=1 // pred_check
      _
    $region3: #{tpu_custom_call.1} parent=1 // pred_check_branch
      %12 = sbr.rel (0) target = $region5
    $region4: #{tpu_custom_call.1} parent=1 // pred_region
      %s14 = ssub.s32 128, 128
      %15 = vsyncadd [#allocation3], %s14
      %s17 = sshll.u32 [#allocation2], 4
      %s18 = int_to_ptr.vmem [resolvable:$true] %s17
      %20 = dma.hbm_to_vmem [thread:$0]  %s0, 128, %s18, [#allocation3]
    $region5: #{tpu_custom_call.1} parent=1 // pred_fallthru
      _
    // Predicated region
    $region6: #{tpu_custom_call.1} parent=1 // pred_check
      _
    $region7: #{tpu_custom_call.1} parent=1 // pred_check_branch
      %22 = sbr.rel (0) target = $region9
    $region8: #{tpu_custom_call.1} parent=1 // pred_region
      %s24 = ssub.s32 512, 512
      %25 = vsyncadd [#allocation6], %s24
      %s26 = sshll.u32 [#allocation5], 4
      %s27 = int_to_ptr.vmem [resolvable:$true] %s26
      %32 = dma.hbm_to_vmem [thread:$0]  %s1, 512, %s27, [#allocation6], 128, 128, 8
    $region9: #{tpu_custom_call.1} parent=1 // pred_fallthru
      _
    // Predicated region
    $region10: #{tpu_custom_call.1} parent=1 // pred_check
      _
    $region11: #{tpu_custom_call.1} parent=1 // pred_check_branch
      %34 = sbr.rel (0) target = $region13
    $region12: #{tpu_custom_call.1} parent=1 // pred_region
      _
    $region13: #{tpu_custom_call.1} parent=1 // pred_fallthru
      _
    // Predicated region
    $region14: #{tpu_custom_call.1} parent=1 // pred_check
      _
    $region15: #{tpu_custom_call.1} parent=1 // pred_check_branch
      %36 = sbr.rel (0) target = $region17
    $region16: #{tpu_custom_call.1} parent=1 // pred_region
      %37 = dma.done [#allocation3], 128
    $region17: #{tpu_custom_call.1} parent=1 // pred_fallthru
      _
    // Predicated region
    $region18: #{tpu_custom_call.1} parent=1 // pred_check
      _
    $region19: #{tpu_custom_call.1} parent=1 // pred_check_branch
      %39 = sbr.rel (0) target = $region21
    $region20: #{tpu_custom_call.1} parent=1 // pred_region
      %40 = dma.done [#allocation6], 512
    $region21: #{tpu_custom_call.1} parent=1 // pred_fallthru
      _
    %v41 = vld [vmem:[#allocation2] sm:$0xff]
    %v42 = vld [vmem:[#allocation5] sm:$0xff]
    %v43 = vld [vmem:[#allocation5 + $0x8] sm:$0xff]
    %v44 = vld [vmem:[#allocation5 + $0x10] sm:$0xff]
    %v45 = vld [vmem:[#allocation5 + $0x18] sm:$0xff]
    %v46 = vld [vmem:[%s2] sm:$0x1]
    %v48 = vlaneseq
    %v49 = vshrl.u32 %v48, 7
    %v50 = vsub.s32 0, %v49
    %v51 = vrot.slane %v46, %v50
    %vm53 = vcmask 261120
    %v55 = vsel %vm53, %v41, 0
    %57 = vmatprep.subr.mxu0 0.0
    %58 = vmatpush1.msra.mxu0 %v42
    %59 = vmatprep.subr.mxu0 0.0
    %60 = vmatpush1.msra.mxu0 %v43
    %61 = vmatprep.subr.mxu0 0.0
    %62 = vmatpush1.msra.mxu0 %v44
    %63 = vmatprep.subr.mxu0 0.0
    %64 = vmatpush1.msra.mxu0 %v45
    %65 = vmatprep.subr.mxu0 0.0
    %66 = vmatpush1.msra.mxu0 0.0
    %67 = vmatprep.subr.mxu0 0.0
    %68 = vmatpush1.msra.mxu0 0.0
    %69 = vmatprep.subr.mxu0 0.0
    %70 = vmatpush1.msra.mxu0 0.0
    %71 = vmatprep.subr.mxu0 0.0
    %72 = vmatpush1.msra.mxu0 0.0
    %73 = vmatprep.subr.mxu0 0.0
    %74 = vmatpush1.msra.mxu0 0.0
    %75 = vmatprep.subr.mxu0 0.0
    %76 = vmatpush1.msra.mxu0 0.0
    %77 = vmatprep.subr.mxu0 0.0
    %78 = vmatpush1.msra.mxu0 0.0
    %79 = vmatprep.subr.mxu0 0.0
    %80 = vmatpush1.msra.mxu0 0.0
    %81 = vmatprep.subr.mxu0 0.0
    %82 = vmatpush1.msra.mxu0 0.0
    %83 = vmatprep.subr.mxu0 0.0
    %84 = vmatpush1.msra.mxu0 0.0
    %85 = vmatprep.subr.mxu0 0.0
    %86 = vmatpush1.msra.mxu0 0.0
    %87 = vmatprep.subr.mxu0 0.0
    %88 = vmatpush1.msra.mxu0 0.0
    %89 = vmatprep.subr.mxu0 0.0
    %90 = vmatpush1.msra.mxu0 0.0
    %91 = vmatprep.subr.mxu0 0.0
    %92 = vmatpush1.msra.mxu0 0.0
    %93 = vmatprep.subr.mxu0 0.0
    %94 = vmatpush1.msra.mxu0 0.0
    %95 = vmatprep.subr.mxu0 0.0
    %96 = vmatpush1.msra.mxu0 0.0
    %97 = vmatprep.subr.mxu0 0.0
    %98 = vmatpush1.msra.mxu0 0.0
    %99 = vmatprep.subr.mxu0 0.0
    %100 = vmatpush1.msra.mxu0 0.0
    %101 = vmatprep.subr.mxu0 0.0
    %102 = vmatpush1.msra.mxu0 0.0
    %103 = vmatprep.subr.mxu0 0.0
    %104 = vmatpush1.msra.mxu0 0.0
    %105 = vmatprep.subr.mxu0 0.0
    %106 = vmatpush1.msra.mxu0 0.0
    %107 = vmatprep.subr.mxu0 0.0
    %108 = vmatpush1.msra.mxu0 0.0
    %109 = vmatprep.subr.mxu0 0.0
    %110 = vmatpush1.msra.mxu0 0.0
    %111 = vmatprep.subr.mxu0 0.0
    %112 = vmatpush1.msra.mxu0 0.0
    %113 = vmatprep.subr.mxu0 0.0
    %114 = vmatpush1.msra.mxu0 0.0
    %115 = vmatprep.subr.mxu0 0.0
    %116 = vmatpush1.msra.mxu0 0.0
    %117 = vmatprep.subr.mxu0 0.0
    %118 = vmatpush1.msra.mxu0 0.0
    %119 = vmatprep.subr.mxu0 0.0
    %120 = vmatpush1.msra.mxu0 0.0
    %121 = vmatprep.mubr.f32.mxu0 0.0
    %122 = vmatmul.mubr.f32.gmra.mrb[0].mxu0 %v55
    %v123 = vpop.f32.mrb[0].mxu0
    %v124 = vadd.f32 %v51, %v123
    %v125 = vpop.f32.mrb[0].mxu0
    %126 = vdwg.mxu0
    %v127 = vmul.f32 %v124, 30.0
    %v128 = vand.u32 2147483647, %v127
    %vm129 = vcmp.le.f32.partialorder %v128, 0.7853982
    %vm130 = vcmp.lt.s32.totalorder %v127, 0
    %v131 = vand.u32 %v127, 2139095040
    %v132 = vshrl.u32 %v131, 23
    %v133 = vsub.s32 %v132, 127
    %v134 = vand.u32 2147483647, %v127
    %v135 = vand.u32 %v134, 8388607
    %v136 = vor.u32 %v135, 8388608
    %v137 = vsub.s32 0, %v136
    %v138 = vadd.s32 %v133, 1
    %vm139 = vcmp.gt.s32.totalorder %v138, 0
    %v140 = vsel %vm139, %v138, 0
    %v141 = vshrl.u32 %v140, 5
    %v142 = vand.u32 %v140, 31
    %v143 = vsub.s32 32, %v142
    %v144 = vshrl.u32 683565275, %v143
    %v145 = vshll.u32 683565275, %v142
    %v146 = vshrl.u32 2475754826, %v143
    %v147 = vor.u32 %v145, %v146
    %v148 = vshll.u32 2475754826, %v142
    %v149 = vshrl.u32 2131351028, %v143
    %v150 = vor.u32 %v148, %v149
    %v151 = vshll.u32 2131351028, %v142
    %v152 = vshrl.u32 2102212464, %v143
    %v153 = vor.u32 %v151, %v152
    %v154 = vshll.u32 2102212464, %v142
    %v155 = vshrl.u32 920167782, %v143
    %v156 = vor.u32 %v154, %v155
    %v157 = vshll.u32 920167782, %v142
    %v158 = vshrl.u32 1326507024, %v143
    %v159 = vor.u32 %v157, %v158
    %vm160 = vcmp.lt.s32.totalorder %v141, 1
    %vm161 = vcmp.lt.s32.totalorder %v141, 2
    %vm162 = vcmp.lt.s32.totalorder %v141, 3
    %vm163 = vcmp.lt.s32.totalorder %v141, 4
    %v164 = vsel %vm160, %v144, %v147
    %v165 = vsel %vm163, %v153, 2102212464
    %v166 = vsel %vm162, %v150, %v165
    %v167 = vsel %vm161, %v164, %v166
    %v168 = vsel %vm160, %v147, %v150
    %v169 = vsel %vm163, %v156, 920167782
    %v170 = vsel %vm162, %v153, %v169
    %v171 = vsel %vm161, %v168, %v170
    %v172 = vsel %vm160, %v150, %v153
    %v173 = vsel %vm163, %v159, 1326507024
    %v174 = vsel %vm162, %v156, %v173
    %v175 = vsel %vm161, %v172, %v174
    %v176 = vshll.u32 %v136, 8
    %v177 = vmul.u32.u64.compose %v176, %v175
    %v178 = vextract.low.u32 %v177
    %v179 = vextract.high.u32 %v177
    %v180 = vmul.u32.u64.compose %v176, %v171
    %v181 = vextract.low.u32 %v180
    %v182 = vextract.high.u32 %v180
    %v183 = vmul.u32 %v176, %v167
    %v184 = vadd.s32 %v179, %v181
    %vm185 = vc.u32 %v179, %v181
    %v186 = vadd.s32 %v182, 1
    %v187 = vsel %vm185, %v186, %v182
    %v188 = vadd.s32 %v183, %v187
    %v189 = vadd.s32 %v188, 536870912
    %v190 = vshrl.u32 %v189, 30
    %v191 = vshll.u32 %v190, 30
    %v192 = vsub.s32 %v188, %v191
    %vm193 = vcmp.lt.s32.totalorder %v192, 0
    %v194 = vsub.s32 0, %v192
    %v195 = vsel %vm193, %v194, %v192
    %v196 = vclz %v195
    %v197 = vsub.s32 %v196, 2
    %vm198 = vcmp.gt.s32.totalorder 0, %v197
    %v199 = vsel %vm198, 0, %v197
    %v200 = vsub.s32 32, %v199
    %v201 = vshll.u32 %v192, %v199
    %v202 = vshrl.u32 %v184, %v200
    %v203 = vor.u32 %v201, %v202
    %v204 = vsub.s32 4294967266, %v199
    %v205 = vadd.s32 %v204, 127
    %v206 = vshll.u32 %v205, 23
    %v207 = vor.u32 4788187, %v206
    %v208 = vand.u32 2147483647, %v207
    %v210 = vcvt.s32.f32 %v203
    %v211 = vmul.f32 %v210, %v208
    %v212 = vxor.u32 %v211, 2147483648
    %v213 = vsel %vm130, %v212, %v211
    %v214 = vsub.s32 4, %v190
    %v215 = vsel %vm130, %v214, %v190
    %v216 = vsel %vm129, %v127, %v213
    %v217 = vsel %vm129, 0, %v215
    %v218 = vcosq.f32.pop %v216
    %v219 = vsinq.f32.pop %v216
    %vm220 = vweird.f32 %v127
    %v221 = vadd.s32 %v217, 3
    %v222 = vand.u32 %v221, 3
    %vm223 = vcmp.lt.s32.totalorder %v222, 2
    %vm224 = vcmp.eq.s32.totalorder %v222, 0
    %v225 = vxor.u32 %v219, 2147483648
    %v226 = vsel %vm224, %v218, %v225
    %vm227 = vcmp.eq.s32.totalorder %v222, 2
    %v228 = vxor.u32 %v218, 2147483648
    %v229 = vsel %vm227, %v228, %v219
    %v230 = vsel %vm223, %v226, %v229
    %v231 = vsel %vm220, nan, %v230
    %232 = vst [vmem:[#allocation7] sm:$0xff] %v231
    // Predicated region
    $region22: #{tpu_custom_call.1} parent=1 // pred_check
      _
    $region23: #{tpu_custom_call.1} parent=1 // pred_check_branch
      %234 = sbr.rel (0) target = $region25
    $region24: #{tpu_custom_call.1} parent=1 // pred_region
      %s236 = ssub.s32 128, 128
      %237 = vsyncadd [#allocation4], %s236
      %s239 = sshll.u32 [#allocation7], 4
      %s240 = int_to_ptr.vmem [resolvable:$true] %s239
      %242 = dma.vmem_to_hbm [thread:$0]  %s240, 128, %s3, [#allocation4]
    $region25: #{tpu_custom_call.1} parent=1 // pred_fallthru
      _
    // Predicated region
    $region26: #{tpu_custom_call.1} parent=1 // pred_check
      _
    $region27: #{tpu_custom_call.1} parent=1 // pred_check_branch
      %244 = sbr.rel (0) target = $region29
    $region28: #{tpu_custom_call.1} parent=1 // pred_region
      %245 = dma.done [#allocation4], 128
    $region29: #{tpu_custom_call.1} parent=1 // pred_fallthru
      _
    %246 = vsyncpa [#allocation3], 1
    %247 = vsyncpa [#allocation6], 1
    %248 = vsyncpa [#allocation4], 1

</llo_original>
